<compile_context>
chip_gen: v7x
topology: tpu7x:2x2x1
jax: 0.10.0
libtpu: 0.0.40
codegen_flags: <defaults>
</compile_context>

<pallas_src>
import math

import jax
import jax.numpy as jnp
from jax.experimental import pallas as pl
from jax.experimental.pallas import tpu as pltpu

_LANE = 128
_MAX_TILE_BYTES = 4 * 1024 * 1024      # per-block footprint target for x / out
_MAX_LANE_TILE = 1024                  # max columns per block (multiple of 128)
_TARGET_FOLD_LANE = 512                # target lane width when folding small n_units
_VMEM_LIMIT_BYTES = 32 * 1024 * 1024   # explicit scoped-VMEM limit (safe on v5e/v6e/v7x)


def _min_sublane(dtype):
    itemsize = jnp.dtype(dtype).itemsize
    return {4: 8, 2: 16, 1: 32}.get(itemsize, 8)


def _choose_fold(rows, n_units):
    """Fold factor k: pack k logical rows into one lane-dense row of width n_units*k."""
    if n_units % _LANE == 0:
        return 1
    k = _LANE // math.gcd(n_units, _LANE)   # smallest k with (n_units*k) % 128 == 0
    # Grow towards the target lane width only while it does not increase the
    # number of remainder rows (rows % k stays the same).
    while n_units * k * 2 <= _TARGET_FOLD_LANE and rows % (k * 2) == rows % k:
        k *= 2
    return k


def _choose_tile_cols(W):
    """Largest divisor of W that is a multiple of 128 and <= _MAX_LANE_TILE."""
    if W <= _MAX_LANE_TILE or W % _LANE != 0:
        return W
    for c in range(_MAX_LANE_TILE, _LANE - 1, -_LANE):
        if W % c == 0:
            return c
    return _MAX_LANE_TILE  # unreachable for W % 128 == 0 (c = 128 always divides)


def _prenorm_kernel(params_ref, x_ref, o_ref):
    # params_ref: (C, 2, tile_cols) f32, VMEM-resident (constant index_map).
    # x_ref / o_ref: (tile_rows, tile_cols).
    j = pl.program_id(1)
    p = params_ref[j]                       # (2, tile_cols)
    shift = p[0:1, :]
    scale = p[1:2, :]
    x = x_ref[...].astype(jnp.float32)
    o_ref[...] = ((x + shift) * scale).astype(o_ref.dtype)


def prenorm_forward(x, shift=None, scale=None):
    """out = (x + shift) * scale; x: [..., n_units]; shift, scale: [n_units] or None."""
    orig_shape = x.shape
    n_units = x.shape[-1]
    if shift is None:
        shift = jnp.zeros((n_units,), jnp.float32)
    if scale is None:
        scale = jnp.ones((n_units,), jnp.float32)
    assert shift.shape == (n_units,) and scale.shape == (n_units,)
    shift32 = shift.astype(jnp.float32)
    scale32 = scale.astype(jnp.float32)

    rows = x.size // n_units if n_units else 0
    if rows == 0 or n_units == 0:
        return x

    # ---- lane-dense re-layout (free row-major reshape) ----
    k = _choose_fold(rows, n_units)
    rows2 = rows // k
    rem = rows - rows2 * k
    x2d = x.reshape(rows, n_units)

    if rows2 == 0:
        # Fewer rows than the fold factor: trivial, do it in plain JAX.
        out2d = ((x2d.astype(jnp.float32) + shift32) * scale32).astype(x.dtype)
        return out2d.reshape(orig_shape)

    W = n_units * k
    x_main = x2d[: rows2 * k].reshape(rows2, W)

    # ---- tile sizing ----
    tile_cols = _choose_tile_cols(W)
    C = pl.cdiv(W, tile_cols)
    itemsize = jnp.dtype(x.dtype).itemsize
    sub = _min_sublane(x.dtype)

    budget_rows = _MAX_TILE_BYTES // max(1, tile_cols * itemsize)
    budget_rows = max(sub, (budget_rows // sub) * sub)
    if rows2 <= sub:
        tile_rows = rows2                                   # full dim (legal block dim)
    else:
        # Cap at ~half the rows (sublane-rounded) so the row axis has >= 2
        # blocks and both v7x TensorCores get work.
        half = (((rows2 + 1) // 2 + sub - 1) // sub) * sub
        tile_rows = min(budget_rows, half)
        if tile_rows > rows2:
            tile_rows = rows2

    grid = (pl.cdiv(rows2, tile_rows), C)

    # Packed per-feature params: (C, 2, tile_cols), constant block index =>
    # one DMA, kept VMEM-resident across all grid steps.
    params = jnp.stack([jnp.tile(shift32, k), jnp.tile(scale32, k)], axis=0)  # (2, W)
    params = params.reshape(2, C, tile_cols).transpose(1, 0, 2)               # (C, 2, tile_cols)

    out_main = pl.pallas_call(
        _prenorm_kernel,
        out_shape=jax.ShapeDtypeStruct((rows2, W), x.dtype),
        grid_spec=pltpu.PrefetchScalarGridSpec(
            num_scalar_prefetch=0,
            grid=grid,
            in_specs=[
                pl.BlockSpec((C, 2, tile_cols), lambda i, j: (0, 0, 0)),       # resident params
                pl.BlockSpec((tile_rows, tile_cols), lambda i, j: (i, j)),     # x
            ],
            out_specs=pl.BlockSpec((tile_rows, tile_cols), lambda i, j: (i, j)),
        ),
        compiler_params=pltpu.CompilerParams(
            dimension_semantics=("parallel", "parallel"),
            vmem_limit_bytes=_VMEM_LIMIT_BYTES,
        ),
    )(params, x_main)

    out_main = out_main.reshape(rows2 * k, n_units)
    if rem == 0:
        return out_main.reshape(orig_shape)

    # Remainder rows (< k, i.e. a handful of tiny rows): plain JAX.
    x_rem = x2d[rows2 * k:]
    out_rem = ((x_rem.astype(jnp.float32) + shift32) * scale32).astype(x.dtype)
    return jnp.concatenate([out_main, out_rem], axis=0).reshape(orig_shape)


if __name__ == "__main__":
    key = jax.random.PRNGKey(0)
    kx, ks, kc = jax.random.split(key, 3)

    # --- check 1: GCNN-like shape, n_units=32 (lane-dense fold, rows divisible by k) ---
    batch, seq, n_units = 2, 8, 32
    x = jax.random.normal(kx, (batch, seq, n_units), dtype=jnp.float32)
    # __init__ registers shift=zeros, scale=ones; use non-trivial values (as-if
    # stop_updates() had run) so the affine path is actually exercised.
    shift = jax.random.normal(ks, (n_units,), dtype=jnp.float32)
    scale = 1.0 + 0.1 * jax.random.normal(kc, (n_units,), dtype=jnp.float32)

    out = jax.block_until_ready(prenorm_forward(x, shift, scale))
    ref = (x + shift) * scale
    assert out.shape == x.shape and out.dtype == x.dtype
    assert jnp.allclose(out, ref, atol=1e-6, rtol=1e-6)

    # --- check 2: rows not divisible by the fold factor -> remainder handled outside the kernel ---
    x_b = jax.random.normal(jax.random.PRNGKey(1), (3, 5, n_units), dtype=jnp.float32)
    out_b = jax.block_until_ready(prenorm_forward(x_b, shift, scale))
    ref_b = (x_b + shift) * scale
    assert out_b.shape == x_b.shape
    assert jnp.allclose(out_b, ref_b, atol=1e-6, rtol=1e-6)

    # --- check 3: lane-aligned n_units (no fold), odd row count -> masked boundary row block ---
    n3 = 256
    x_c = jax.random.normal(jax.random.PRNGKey(2), (5, 7, n3), dtype=jnp.float32)
    sh3 = jax.random.normal(jax.random.PRNGKey(3), (n3,), dtype=jnp.float32)
    sc3 = 1.0 + 0.1 * jax.random.normal(jax.random.PRNGKey(4), (n3,), dtype=jnp.float32)
    out_c = jax.block_until_ready(prenorm_forward(x_c, sh3, sc3))
    ref_c = (x_c + sh3) * sc3
    assert out_c.shape == x_c.shape
    assert jnp.allclose(out_c, ref_c, atol=1e-6, rtol=1e-6)

    print("KERNEL_OK")
</pallas_src>

<mosaic_0001>
module attributes {stable_mosaic.version = 11 : i64} {
  func.func @_prenorm_kernel(%arg0: i32, %arg1: i32, %arg2: memref<1x2x512xf32, #tpu.memory_space<vmem>>, %arg3: memref<1x512xf32, #tpu.memory_space<vmem>>, %arg4: memref<1x512xf32, #tpu.memory_space<vmem>>) attributes {dimension_semantics = [#tpu.dimension_semantics<parallel>, #tpu.dimension_semantics<parallel>], iteration_bounds = array<i64: 1, 1>, scalar_prefetch = 0 : i64, scratch_operands = 0 : i64, tpu.core_type = #tpu.core_type<tc>, window_params = [{pipeline_mode = #tpu.pipeline_mode<synchronous>, transform_indices = @transform_0, window_bounds = array<i64: 1, 2, 512>}, {transform_indices = @transform_1, window_bounds = array<i64: 1, 512>}, {transform_indices = @transform_2, window_bounds = array<i64: 1, 512>}]} {
    %0 = arith.index_cast %arg1 : i32 to index
    %c0 = arith.constant 0 : index
    %c0_0 = arith.constant 0 : index
    %1 = vector.load %arg2[%0, %c0, %c0_0] : memref<1x2x512xf32, #tpu.memory_space<vmem>>, vector<1x2x512xf32>
    %2 = vector.shape_cast %1 : vector<1x2x512xf32> to vector<2x512xf32>
    %3 = vector.extract_strided_slice %2 {offsets = [0, 0], sizes = [1, 512], strides = [1, 1]} : vector<2x512xf32> to vector<1x512xf32>
    %4 = vector.extract_strided_slice %2 {offsets = [1, 0], sizes = [1, 512], strides = [1, 1]} : vector<2x512xf32> to vector<1x512xf32>
    %c0_1 = arith.constant 0 : index
    %c0_2 = arith.constant 0 : index
    %5 = vector.load %arg3[%c0_1, %c0_2] : memref<1x512xf32, #tpu.memory_space<vmem>>, vector<1x512xf32>
    %6 = arith.addf %5, %3 : vector<1x512xf32>
    %7 = arith.mulf %6, %4 : vector<1x512xf32>
    %c0_3 = arith.constant 0 : index
    %c0_4 = arith.constant 0 : index
    %8 = vector.load %arg4[%c0_3, %c0_4] : memref<1x512xf32, #tpu.memory_space<vmem>>, vector<1x512xf32>
    tpu.vector_store %arg4[%c0_3, %c0_4], %7 {strides = array<i32>} : memref<1x512xf32, #tpu.memory_space<vmem>>, vector<1x512xf32>,
    return
  }
  func.func @transform_0(%arg0: i32, %arg1: i32) -> (i32, i32, i32) {
    %c0_i32 = arith.constant 0 : i32
    %c0_i32_0 = arith.constant 0 : i32
    %c0_i32_1 = arith.constant 0 : i32
    %c0_i32_2 = arith.constant 0 : i32
    return %c0_i32, %c0_i32_0, %c0_i32_1 : i32, i32, i32
  }
  func.func @transform_1(%arg0: i32, %arg1: i32) -> (i32, i32) {
    %c0_i32 = arith.constant 0 : i32
    return %arg0, %arg1 : i32, i32
  }
  func.func @transform_2(%arg0: i32, %arg1: i32) -> (i32, i32) {
    %c0_i32 = arith.constant 0 : i32
    return %arg0, %arg1 : i32, i32
  }
}

</mosaic_0001>

<llo_original>
// kernel: tpu_custom_call.1
$region0: #{tpu_custom_call.1}
  #allocation0 [shape = 'u32[]', space=smem, size = 0x4, offset = 0x4, fixed_abs, tag = 'smem constant byte address 0x4 - core index']
  #allocation1 [shape = 'u32[144,128]{1,0:T(1,128)}', space=vmem, size = 0x12000, scoped, tag = 'internal scratch']
  %s0 = inlined_call_operand.hbm [shape: f32[1,2,512], index: 0, kind: input, shape index: {}]
  %s1 = inlined_call_operand.hbm [shape: f32[1,512], index: 1, kind: input, shape index: {}]
  %s2 = inlined_call_operand.hbm [shape: f32[1,512], index: 2, kind: output, shape index: {}]
  %s3 = sld [smem:[#allocation0]]
  $region26: #{tpu_custom_call.1} parent=0
    _
  %s5 = ssub.s32 1, %s3
  %s6 = scalar_select 0, %s5, %s3
  $region1: #{tpu_custom_call.1} parent=0
    #allocation2 [shape = 'u8[4096]{0}', space=vmem, size = 0x1000, scoped, tag = 'input window, operand 0, single buffered']
    #allocation3 [shape = 's32[1]{0}', space=sflag, size = 0x4, scoped, tag = 'scoped memory for tpu_custom_call.1']
    #allocation4 [shape = 's32[1]{0}', space=sflag, size = 0x4, scoped, tag = 'scoped memory for tpu_custom_call.1']
    #allocation5 [shape = 'u8[2048]{0}', space=vmem, size = 0x800, scoped, tag = 'input window, operand 1, single buffered']
    #allocation6 [shape = 's32[1]{0}', space=sflag, size = 0x4, scoped, tag = 'scoped memory for tpu_custom_call.1']
    #allocation7 [shape = 'u8[2048]{0}', space=vmem, size = 0x800, scoped, tag = 'output window, operand 0, single buffered']
    %7 = vsyncpa [#allocation3], 0
    %8 = vsyncpa [#allocation6], 0
    %9 = vsyncpa [#allocation4], 0
    // Predicated region
    $region2: #{tpu_custom_call.1} parent=1 // pred_check
      _
    $region3: #{tpu_custom_call.1} parent=1 // pred_check_branch
      %11 = sbr.rel (0) target = $region5
    $region4: #{tpu_custom_call.1} parent=1 // pred_region
      %s13 = ssub.s32 128, 128
      %14 = vsyncadd [#allocation3], %s13
      %s16 = sshll.u32 [#allocation2], 4
      %s17 = int_to_ptr.vmem [resolvable:$true] %s16
      %19 = dma.hbm_to_vmem [thread:$0]  %s0, 128, %s17, [#allocation3]
    $region5: #{tpu_custom_call.1} parent=1 // pred_fallthru
      _
    // Predicated region
    $region6: #{tpu_custom_call.1} parent=1 // pred_check
      _
    $region7: #{tpu_custom_call.1} parent=1 // pred_check_branch
      %21 = sbr.rel (0) target = $region9
    $region8: #{tpu_custom_call.1} parent=1 // pred_region
      %s23 = ssub.s32 64, 64
      %24 = vsyncadd [#allocation6], %s23
      %s26 = sshll.u32 [#allocation5], 4
      %s27 = int_to_ptr.vmem [resolvable:$true] %s26
      %29 = dma.hbm_to_vmem [thread:$0]  %s1, 64, %s27, [#allocation6]
    $region9: #{tpu_custom_call.1} parent=1 // pred_fallthru
      _
    // Predicated region
    $region10: #{tpu_custom_call.1} parent=1 // pred_check
      _
    $region11: #{tpu_custom_call.1} parent=1 // pred_check_branch
      %31 = sbr.rel (0) target = $region13
    $region12: #{tpu_custom_call.1} parent=1 // pred_region
      %32 = dma.done [#allocation3], 128
    $region13: #{tpu_custom_call.1} parent=1 // pred_fallthru
      _
    // Predicated region
    $region14: #{tpu_custom_call.1} parent=1 // pred_check
      _
    $region15: #{tpu_custom_call.1} parent=1 // pred_check_branch
      %34 = sbr.rel (0) target = $region17
    $region16: #{tpu_custom_call.1} parent=1 // pred_region
      %35 = dma.done [#allocation6], 64
    $region17: #{tpu_custom_call.1} parent=1 // pred_fallthru
      _
    %s36 = smul.u32 0, 4
    %s37 = smul.addr %s36, 2
    %s38 = scalar_lea.vmem [#allocation2], %s37
    %v39 = vld [vmem:[%s38] sm:$0xff]
    %v40 = vld [vmem:[#allocation5] sm:$0xf]
    %v43 = vunpack.c.l.s4 1966171168
    %v44 = vunpack.c.0.s8 %v43
    %v45 = vlaneseq
    %v46 = vshrl.u32 %v45, 7
    %v47 = vsub.s32 %v44, %v46
    %v48 = vrot.slane %v39, %v47
    %v50 = vadd.f32 %v40, %v48
    %v51 = vcombine.high %v48, %v48
    %v53 = vmul.f32 %v50, %v51
    %v54 = vlaneseq
    %vm55 = vcmp.ge.s32.totalorder %v54, 0
    %vm56 = vcmp.lt.s32.totalorder %v54, 512
    %vm57 = vmand %vm55, %vm56
    %58 = vst.msk [vmem:[#allocation7] sm:$0xf] %vm57, %v53
    // Predicated region
    $region18: #{tpu_custom_call.1} parent=1 // pred_check
      _
    $region19: #{tpu_custom_call.1} parent=1 // pred_check_branch
      %60 = sbr.rel (0) target = $region21
    $region20: #{tpu_custom_call.1} parent=1 // pred_region
      %s62 = ssub.s32 64, 64
      %63 = vsyncadd [#allocation4], %s62
      %s65 = sshll.u32 [#allocation7], 4
      %s66 = int_to_ptr.vmem [resolvable:$true] %s65
      %68 = dma.vmem_to_hbm [thread:$0]  %s66, 64, %s2, [#allocation4]
    $region21: #{tpu_custom_call.1} parent=1 // pred_fallthru
      _
    // Predicated region
    $region22: #{tpu_custom_call.1} parent=1 // pred_check
      _
    $region23: #{tpu_custom_call.1} parent=1 // pred_check_branch
      %70 = sbr.rel (0) target = $region25
    $region24: #{tpu_custom_call.1} parent=1 // pred_region
      %71 = dma.done [#allocation4], 64
    $region25: #{tpu_custom_call.1} parent=1 // pred_fallthru
      _
    %72 = vsyncpa [#allocation3], 1
    %73 = vsyncpa [#allocation6], 1
    %74 = vsyncpa [#allocation4], 1

</llo_original>
